<compile_context>
chip_gen: v7x
topology: tpu7x:2x2x1
jax: 0.10.0
libtpu: 0.0.40
codegen_flags: <defaults>
</compile_context>

<pallas_src>
import jax
import jax.numpy as jnp
from jax.experimental import pallas as pl
from jax.experimental.pallas import tpu as pltpu


def _round_up(x, m):
    return ((x + m - 1) // m) * m


def gated_fusion_kernel(xt_ref, xv_ref,
                        wt_ref, bt_ref,
                        wv_ref, bv_ref,
                        wzt_ref, wzv_ref, bz_ref,
                        o_ref):
    # Layer 1: two MXU matmuls (f32 accumulation), tanh on the EUP in f32.
    text = jnp.tanh(
        jnp.dot(xt_ref[...], wt_ref[...], preferred_element_type=jnp.float32)
        + bt_ref[...])
    vis = jnp.tanh(
        jnp.dot(xv_ref[...], wv_ref[...], preferred_element_type=jnp.float32)
        + bv_ref[...])

    # Gate: cat([text, vis]) @ W_z^T == text @ Wz_t^T + vis @ Wz_v^T.
    # Splitting W_z avoids materializing the (tm, 2*out) concat in VMEM.
    gdt = wzt_ref.dtype
    z = jax.nn.sigmoid(
        jnp.dot(text.astype(gdt), wzt_ref[...], preferred_element_type=jnp.float32)
        + jnp.dot(vis.astype(gdt), wzv_ref[...], preferred_element_type=jnp.float32)
        + bz_ref[...])

    # h = z*text + (1-z)*vis  ==  vis + z*(text - vis)   (one fewer VPU op)
    o_ref[...] = (vis + z * (text - vis)).astype(o_ref.dtype)


def _choose_tm(n, in_size, out_size, itemsize, requested_tm):
    """Row tile: large (amortize ~0.35us/grid-step), VMEM-safe, multiple of 8."""
    # Double-buffered per-row bytes for the pipelined tiles (x_t + x_v + out).
    bytes_per_row = (2 * in_size + out_size) * itemsize * 2
    vmem_budget = 24 * 1024 * 1024   # conservative; fits v5e/v6e/v7x scoped VMEM
    cap = max(8, (vmem_budget // max(bytes_per_row, 1)) // 8 * 8)
    tm = min(_round_up(requested_tm, 8), cap, _round_up(n, 8))
    return max(8, tm)


def gated_fusion_feature(text_features, vis_features, params, *, tm=1024):
    """text_features, vis_features: (..., in_size). Returns (..., out_size)."""
    w_t, b_t = params["w_t"], params["b_t"]
    w_v, b_v = params["w_v"], params["b_v"]
    w_z, b_z = params["w_z"], params["b_z"]

    in_size = text_features.shape[-1]
    out_size = w_t.shape[0]
    # As in the PyTorch module, w_z = Linear(2*in_size, out_size) only consumes
    # cat([text, vis]) (2*out_size features) when in_size == out_size.
    assert in_size == out_size, "GatedFusionFeature requires in_size == out_size"
    assert vis_features.shape == text_features.shape
    assert w_z.shape == (out_size, 2 * in_size)

    lead = text_features.shape[:-1]
    n = 1
    for d in lead:
        n *= d
    xt = text_features.reshape(n, in_size)
    xv = vis_features.reshape(n, in_size)

    dtype = text_features.dtype
    itemsize = jnp.dtype(dtype).itemsize
    tile_m = _choose_tm(n, in_size, out_size, itemsize, tm)
    grid = (pl.cdiv(n, tile_m),)

    # Pre-transpose weights to (K, N) so the kernel does plain x @ W; split the
    # gate weight into its text / vis halves (no in-kernel concat needed).
    wt_T = w_t.T                          # (in, out)
    wv_T = w_v.T                          # (in, out)
    wzt_T = w_z[:, :out_size].T           # (out, out) -- multiplies `text`
    wzv_T = w_z[:, out_size:].T           # (out, out) -- multiplies `vis`
    bt2 = b_t.reshape(1, out_size)
    bv2 = b_v.reshape(1, out_size)
    bz2 = b_z.reshape(1, out_size)

    # VMEM limit derived from the actual working set (tiles double-buffered +
    # resident weights); keeps v7x (64 MiB physical) safe while giving headroom.
    w_itemsize = jnp.dtype(w_t.dtype).itemsize
    tiles_bytes = (2 * in_size + out_size) * tile_m * itemsize * 2
    weights_bytes = (2 * in_size * out_size + 2 * out_size * out_size
                     + 3 * out_size) * w_itemsize
    vmem_limit = int(min(48 * 2**20,
                         max(32 * 2**20, 2 * (tiles_bytes + weights_bytes))))

    resident = lambda i: (0, 0)   # weights/biases stay resident across the grid

    out = pl.pallas_call(
        gated_fusion_kernel,
        out_shape=jax.ShapeDtypeStruct((n, out_size), dtype),
        grid_spec=pltpu.PrefetchScalarGridSpec(
            num_scalar_prefetch=0,
            grid=grid,
            in_specs=[
                pl.BlockSpec((tile_m, in_size), lambda i: (i, 0)),    # x_t rows
                pl.BlockSpec((tile_m, in_size), lambda i: (i, 0)),    # x_v rows
                pl.BlockSpec((in_size, out_size), resident),          # W_t^T
                pl.BlockSpec((1, out_size), resident),                # b_t
                pl.BlockSpec((in_size, out_size), resident),          # W_v^T
                pl.BlockSpec((1, out_size), resident),                # b_v
                pl.BlockSpec((out_size, out_size), resident),         # W_z^T (text half)
                pl.BlockSpec((out_size, out_size), resident),         # W_z^T (vis half)
                pl.BlockSpec((1, out_size), resident),                # b_z
            ],
            out_specs=pl.BlockSpec((tile_m, out_size), lambda i: (i, 0)),
        ),
        compiler_params=pltpu.CompilerParams(
            dimension_semantics=("parallel",),
            vmem_limit_bytes=vmem_limit,
        ),
    )(xt, xv, wt_T, bt2, wv_T, bv2, wzt_T, wzv_T, bz2)

    return out.reshape(*lead, out_size)


def init_params(key, in_size, out_size, dtype=jnp.float32):
    """Deterministic synthetic init mirroring nn.Linear shapes."""
    ks = jax.random.split(key, 6)

    def lin(kw, kb, fan_in, fan_out):
        bound = 1.0 / (fan_in ** 0.5)
        w = jax.random.uniform(kw, (fan_out, fan_in), dtype, -bound, bound)
        b = jax.random.uniform(kb, (fan_out,), dtype, -bound, bound)
        return w, b

    w_t, b_t = lin(ks[0], ks[1], in_size, out_size)
    w_v, b_v = lin(ks[2], ks[3], in_size, out_size)
    w_z, b_z = lin(ks[4], ks[5], in_size * 2, out_size)
    return dict(w_t=w_t, b_t=b_t, w_v=w_v, b_v=b_v, w_z=w_z, b_z=b_z)


def reference(text_features, vis_features, params):
    text = jnp.tanh(text_features @ params["w_t"].T + params["b_t"])
    vis = jnp.tanh(vis_features @ params["w_v"].T + params["b_v"])
    mm = jnp.concatenate([text, vis], axis=-1)
    z = jax.nn.sigmoid(mm @ params["w_z"].T + params["b_z"])
    return z * text + (1.0 - z) * vis


if __name__ == "__main__":
    # in_size == out_size is required by the module (w_z consumes cat([text, vis])).
    # 128-wide features keep all loads/stores lane-dense (no masked vst).
    batch, seq = 2, 64
    in_size = out_size = 128

    key = jax.random.PRNGKey(0)
    k_p, k_t, k_v = jax.random.split(key, 3)
    params = init_params(k_p, in_size, out_size)
    text_features = jax.random.normal(k_t, (batch, seq, in_size), jnp.float32)
    vis_features = jax.random.normal(k_v, (batch, seq, in_size), jnp.float32)

    out = gated_fusion_feature(text_features, vis_features, params)
    out = jax.block_until_ready(out)

    ref = reference(text_features, vis_features, params)
    assert out.shape == (batch, seq, out_size)
    assert jnp.allclose(out, ref, atol=1e-4, rtol=1e-4)

    print("KERNEL_OK")
</pallas_src>

<mosaic_0001>
module attributes {stable_mosaic.version = 11 : i64} {
  func.func @gated_fusion_kernel(%arg0: i32, %arg1: memref<128x128xf32, #tpu.memory_space<vmem>>, %arg2: memref<128x128xf32, #tpu.memory_space<vmem>>, %arg3: memref<128x128xf32, #tpu.memory_space<vmem>>, %arg4: memref<1x128xf32, #tpu.memory_space<vmem>>, %arg5: memref<128x128xf32, #tpu.memory_space<vmem>>, %arg6: memref<1x128xf32, #tpu.memory_space<vmem>>, %arg7: memref<128x128xf32, #tpu.memory_space<vmem>>, %arg8: memref<128x128xf32, #tpu.memory_space<vmem>>, %arg9: memref<1x128xf32, #tpu.memory_space<vmem>>, %arg10: memref<128x128xf32, #tpu.memory_space<vmem>>) attributes {dimension_semantics = [#tpu.dimension_semantics<parallel>], iteration_bounds = array<i64: 1>, scalar_prefetch = 0 : i64, scratch_operands = 0 : i64, tpu.core_type = #tpu.core_type<tc>, window_params = [{transform_indices = @transform_0, window_bounds = array<i64: 128, 128>}, {transform_indices = @transform_1, window_bounds = array<i64: 128, 128>}, {pipeline_mode = #tpu.pipeline_mode<synchronous>, transform_indices = @transform_2, window_bounds = array<i64: 128, 128>}, {pipeline_mode = #tpu.pipeline_mode<synchronous>, transform_indices = @transform_3, window_bounds = array<i64: 1, 128>}, {pipeline_mode = #tpu.pipeline_mode<synchronous>, transform_indices = @transform_4, window_bounds = array<i64: 128, 128>}, {pipeline_mode = #tpu.pipeline_mode<synchronous>, transform_indices = @transform_5, window_bounds = array<i64: 1, 128>}, {pipeline_mode = #tpu.pipeline_mode<synchronous>, transform_indices = @transform_6, window_bounds = array<i64: 128, 128>}, {pipeline_mode = #tpu.pipeline_mode<synchronous>, transform_indices = @transform_7, window_bounds = array<i64: 128, 128>}, {pipeline_mode = #tpu.pipeline_mode<synchronous>, transform_indices = @transform_8, window_bounds = array<i64: 1, 128>}, {transform_indices = @transform_9, window_bounds = array<i64: 128, 128>}]} {
    %c0 = arith.constant 0 : index
    %c0_0 = arith.constant 0 : index
    %0 = vector.load %arg1[%c0, %c0_0] : memref<128x128xf32, #tpu.memory_space<vmem>>, vector<128x128xf32>
    %c0_1 = arith.constant 0 : index
    %c0_2 = arith.constant 0 : index
    %1 = vector.load %arg3[%c0_1, %c0_2] : memref<128x128xf32, #tpu.memory_space<vmem>>, vector<128x128xf32>
    %cst = arith.constant dense<0.000000e+00> : vector<128x128xf32>
    %2 = tpu.matmul %0, %1, %cst {dimension_numbers = #tpu.dot_dimension_numbers<[1], [0], [0], [1], [0, 0, 1, 1], [], []>} : vector<128x128xf32>, vector<128x128xf32>, vector<128x128xf32> -> vector<128x128xf32>
    %c0_3 = arith.constant 0 : index
    %c0_4 = arith.constant 0 : index
    %3 = vector.load %arg4[%c0_3, %c0_4] : memref<1x128xf32, #tpu.memory_space<vmem>>, vector<1x128xf32>
    %4 = vector.broadcast %3 : vector<1x128xf32> to vector<128x128xf32>
    %5 = arith.addf %2, %4 : vector<128x128xf32>
    %6 = math.tanh %5 : vector<128x128xf32>
    %c0_5 = arith.constant 0 : index
    %c0_6 = arith.constant 0 : index
    %7 = vector.load %arg2[%c0_5, %c0_6] : memref<128x128xf32, #tpu.memory_space<vmem>>, vector<128x128xf32>
    %c0_7 = arith.constant 0 : index
    %c0_8 = arith.constant 0 : index
    %8 = vector.load %arg5[%c0_7, %c0_8] : memref<128x128xf32, #tpu.memory_space<vmem>>, vector<128x128xf32>
    %cst_9 = arith.constant dense<0.000000e+00> : vector<128x128xf32>
    %9 = tpu.matmul %7, %8, %cst_9 {dimension_numbers = #tpu.dot_dimension_numbers<[1], [0], [0], [1], [0, 0, 1, 1], [], []>} : vector<128x128xf32>, vector<128x128xf32>, vector<128x128xf32> -> vector<128x128xf32>
    %c0_10 = arith.constant 0 : index
    %c0_11 = arith.constant 0 : index
    %10 = vector.load %arg6[%c0_10, %c0_11] : memref<1x128xf32, #tpu.memory_space<vmem>>, vector<1x128xf32>
    %11 = vector.broadcast %10 : vector<1x128xf32> to vector<128x128xf32>
    %12 = arith.addf %9, %11 : vector<128x128xf32>
    %13 = math.tanh %12 : vector<128x128xf32>
    %c0_12 = arith.constant 0 : index
    %c0_13 = arith.constant 0 : index
    %14 = vector.load %arg7[%c0_12, %c0_13] : memref<128x128xf32, #tpu.memory_space<vmem>>, vector<128x128xf32>
    %cst_14 = arith.constant dense<0.000000e+00> : vector<128x128xf32>
    %15 = tpu.matmul %6, %14, %cst_14 {dimension_numbers = #tpu.dot_dimension_numbers<[1], [0], [0], [1], [0, 0, 1, 1], [], []>} : vector<128x128xf32>, vector<128x128xf32>, vector<128x128xf32> -> vector<128x128xf32>
    %c0_15 = arith.constant 0 : index
    %c0_16 = arith.constant 0 : index
    %16 = vector.load %arg8[%c0_15, %c0_16] : memref<128x128xf32, #tpu.memory_space<vmem>>, vector<128x128xf32>
    %cst_17 = arith.constant dense<0.000000e+00> : vector<128x128xf32>
    %17 = tpu.matmul %13, %16, %cst_17 {dimension_numbers = #tpu.dot_dimension_numbers<[1], [0], [0], [1], [0, 0, 1, 1], [], []>} : vector<128x128xf32>, vector<128x128xf32>, vector<128x128xf32> -> vector<128x128xf32>
    %18 = arith.addf %15, %17 : vector<128x128xf32>
    %c0_18 = arith.constant 0 : index
    %c0_19 = arith.constant 0 : index
    %19 = vector.load %arg9[%c0_18, %c0_19] : memref<1x128xf32, #tpu.memory_space<vmem>>, vector<1x128xf32>
    %20 = vector.broadcast %19 : vector<1x128xf32> to vector<128x128xf32>
    %21 = arith.addf %18, %20 : vector<128x128xf32>
    %22 = arith.negf %21 : vector<128x128xf32>
    %23 = math.exp %22 : vector<128x128xf32>
    %cst_20 = arith.constant 1.000000e+00 : f32
    %24 = vector.broadcast %cst_20 : f32 to vector<128x128xf32>
    %25 = arith.addf %24, %23 : vector<128x128xf32>
    %26 = arith.divf %24, %25 : vector<128x128xf32>
    %27 = arith.subf %6, %13 : vector<128x128xf32>
    %28 = arith.mulf %26, %27 : vector<128x128xf32>
    %29 = arith.addf %13, %28 : vector<128x128xf32>
    %c0_21 = arith.constant 0 : index
    %c0_22 = arith.constant 0 : index
    %30 = vector.load %arg10[%c0_21, %c0_22] : memref<128x128xf32, #tpu.memory_space<vmem>>, vector<128x128xf32>
    tpu.vector_store %arg10[%c0_21, %c0_22], %29 {strides = array<i32>} : memref<128x128xf32, #tpu.memory_space<vmem>>, vector<128x128xf32>,
    return
  }
  func.func @transform_0(%arg0: i32) -> (i32, i32) {
    %c0_i32 = arith.constant 0 : i32
    %c0_i32_0 = arith.constant 0 : i32
    return %arg0, %c0_i32 : i32, i32
  }
  func.func @transform_1(%arg0: i32) -> (i32, i32) {
    %c0_i32 = arith.constant 0 : i32
    %c0_i32_0 = arith.constant 0 : i32
    return %arg0, %c0_i32 : i32, i32
  }
  func.func @transform_2(%arg0: i32) -> (i32, i32) {
    %c0_i32 = arith.constant 0 : i32
    %c0_i32_0 = arith.constant 0 : i32
    %c0_i32_1 = arith.constant 0 : i32
    return %c0_i32, %c0_i32_0 : i32, i32
  }
  func.func @transform_3(%arg0: i32) -> (i32, i32) {
    %c0_i32 = arith.constant 0 : i32
    %c0_i32_0 = arith.constant 0 : i32
    %c0_i32_1 = arith.constant 0 : i32
    return %c0_i32, %c0_i32_0 : i32, i32
  }
  func.func @transform_4(%arg0: i32) -> (i32, i32) {
    %c0_i32 = arith.constant 0 : i32
    %c0_i32_0 = arith.constant 0 : i32
    %c0_i32_1 = arith.constant 0 : i32
    return %c0_i32, %c0_i32_0 : i32, i32
  }
  func.func @transform_5(%arg0: i32) -> (i32, i32) {
    %c0_i32 = arith.constant 0 : i32
    %c0_i32_0 = arith.constant 0 : i32
    %c0_i32_1 = arith.constant 0 : i32
    return %c0_i32, %c0_i32_0 : i32, i32
  }
  func.func @transform_6(%arg0: i32) -> (i32, i32) {
    %c0_i32 = arith.constant 0 : i32
    %c0_i32_0 = arith.constant 0 : i32
    %c0_i32_1 = arith.constant 0 : i32
    return %c0_i32, %c0_i32_0 : i32, i32
  }
  func.func @transform_7(%arg0: i32) -> (i32, i32) {
    %c0_i32 = arith.constant 0 : i32
    %c0_i32_0 = arith.constant 0 : i32
    %c0_i32_1 = arith.constant 0 : i32
    return %c0_i32, %c0_i32_0 : i32, i32
  }
  func.func @transform_8(%arg0: i32) -> (i32, i32) {
    %c0_i32 = arith.constant 0 : i32
    %c0_i32_0 = arith.constant 0 : i32
    %c0_i32_1 = arith.constant 0 : i32
    return %c0_i32, %c0_i32_0 : i32, i32
  }
  func.func @transform_9(%arg0: i32) -> (i32, i32) {
    %c0_i32 = arith.constant 0 : i32
    %c0_i32_0 = arith.constant 0 : i32
    return %arg0, %c0_i32 : i32, i32
  }
}

</mosaic_0001>

<llo_original>
// kernel: tpu_custom_call.1
$region0: #{tpu_custom_call.1}
  #allocation0 [shape = 'u32[]', space=smem, size = 0x4, offset = 0x4, fixed_abs, tag = 'smem constant byte address 0x4 - core index']
  #allocation1 [shape = 'u32[144,128]{1,0:T(1,128)}', space=vmem, size = 0x12000, scoped, tag = 'internal scratch']
  %s0 = inlined_call_operand.hbm [shape: f32[128,128], index: 0, kind: input, shape index: {}]
  %s1 = inlined_call_operand.hbm [shape: f32[128,128], index: 1, kind: input, shape index: {}]
  %s2 = inlined_call_operand.hbm [shape: f32[128,128], index: 2, kind: input, shape index: {}]
  %s3 = inlined_call_operand.vmem [shape: f32[1,128], index: 3, kind: input, shape index: {}]
  %s4 = inlined_call_operand.hbm [shape: f32[128,128], index: 4, kind: input, shape index: {}]
  %s5 = inlined_call_operand.vmem [shape: f32[1,128], index: 5, kind: input, shape index: {}]
  %s6 = inlined_call_operand.hbm [shape: f32[128,128], index: 6, kind: input, shape index: {}]
  %s7 = inlined_call_operand.hbm [shape: f32[128,128], index: 7, kind: input, shape index: {}]
  %s8 = inlined_call_operand.vmem [shape: f32[1,128], index: 8, kind: input, shape index: {}]
  %s9 = inlined_call_operand.hbm [shape: f32[128,128], index: 9, kind: output, shape index: {}]
  %s10 = sld [smem:[#allocation0]]
  $region70: #{tpu_custom_call.1} parent=0
    _
  %s12 = ssub.s32 1, %s10
  %s13 = scalar_select 0, %s12, %s10
  $region1: #{tpu_custom_call.1} parent=0
    #allocation2 [shape = 'u8[65536]{0}', space=vmem, size = 0x10000, scoped, tag = 'input window, operand 0, single buffered']
    #allocation3 [shape = 's32[1]{0}', space=sflag, size = 0x4, scoped, tag = 'scoped memory for tpu_custom_call.1']
    #allocation4 [shape = 's32[1]{0}', space=sflag, size = 0x4, scoped, tag = 'scoped memory for tpu_custom_call.1']
    #allocation5 [shape = 'u8[65536]{0}', space=vmem, size = 0x10000, scoped, tag = 'input window, operand 1, single buffered']
    #allocation6 [shape = 's32[1]{0}', space=sflag, size = 0x4, scoped, tag = 'scoped memory for tpu_custom_call.1']
    #allocation7 [shape = 'u8[65536]{0}', space=vmem, size = 0x10000, scoped, tag = 'input window, operand 2, single buffered']
    #allocation8 [shape = 'u8[65536]{0}', space=vmem, size = 0x10000, scoped, tag = 'input window, operand 4, single buffered']
    #allocation9 [shape = 's32[1]{0}', space=sflag, size = 0x4, scoped, tag = 'scoped memory for tpu_custom_call.1']
    #allocation10 [shape = 'u8[65536]{0}', space=vmem, size = 0x10000, scoped, tag = 'input window, operand 6, single buffered']
    #allocation11 [shape = 'u8[65536]{0}', space=vmem, size = 0x10000, scoped, tag = 'input window, operand 7, single buffered']
    #allocation12 [shape = 's32[1]{0}', space=sflag, size = 0x4, scoped, tag = 'scoped memory for tpu_custom_call.1']
    #allocation13 [shape = 'u8[65536]{0}', space=vmem, size = 0x10000, scoped, tag = 'output window, operand 0, single buffered']
    %14 = vsyncpa [#allocation3], 0
    %15 = vsyncpa [#allocation6], 0
    %16 = vsyncpa [#allocation9], 0
    %17 = vsyncpa [#allocation12], 0
    %18 = vsyncpa [#allocation4], 0
    // Predicated region
    $region2: #{tpu_custom_call.1} parent=1 // pred_check
      _
    $region3: #{tpu_custom_call.1} parent=1 // pred_check_branch
      %20 = sbr.rel (0) target = $region5
    $region4: #{tpu_custom_call.1} parent=1 // pred_region
      %s22 = ssub.s32 2048, 2048
      %23 = vsyncadd [#allocation3], %s22
      %s24 = sshll.u32 [#allocation2], 4
      %s25 = int_to_ptr.vmem [resolvable:$true] %s24
      %30 = dma.hbm_to_vmem [thread:$0]  %s0, 2048, %s25, [#allocation3], 128, 128, 8
    $region5: #{tpu_custom_call.1} parent=1 // pred_fallthru
      _
    // Predicated region
    $region6: #{tpu_custom_call.1} parent=1 // pred_check
      _
    $region7: #{tpu_custom_call.1} parent=1 // pred_check_branch
      %32 = sbr.rel (0) target = $region9
    $region8: #{tpu_custom_call.1} parent=1 // pred_region
      %s34 = ssub.s32 2048, 2048
      %35 = vsyncadd [#allocation6], %s34
      %s36 = sshll.u32 [#allocation5], 4
      %s37 = int_to_ptr.vmem [resolvable:$true] %s36
      %42 = dma.hbm_to_vmem [thread:$0]  %s1, 2048, %s37, [#allocation6], 128, 128, 8
    $region9: #{tpu_custom_call.1} parent=1 // pred_fallthru
      _
    // Predicated region
    $region10: #{tpu_custom_call.1} parent=1 // pred_check
      _
    $region11: #{tpu_custom_call.1} parent=1 // pred_check_branch
      %44 = sbr.rel (0) target = $region13
    $region12: #{tpu_custom_call.1} parent=1 // pred_region
      %s46 = ssub.s32 2048, 2048
      %47 = vsyncadd [#allocation6], %s46
      %s48 = sshll.u32 [#allocation7], 4
      %s49 = int_to_ptr.vmem [resolvable:$true] %s48
      %54 = dma.hbm_to_vmem [thread:$0]  %s2, 2048, %s49, [#allocation6], 128, 128, 8
    $region13: #{tpu_custom_call.1} parent=1 // pred_fallthru
      _
    // Predicated region
    $region14: #{tpu_custom_call.1} parent=1 // pred_check
      _
    $region15: #{tpu_custom_call.1} parent=1 // pred_check_branch
      %56 = sbr.rel (0) target = $region17
    $region16: #{tpu_custom_call.1} parent=1 // pred_region
      _
    $region17: #{tpu_custom_call.1} parent=1 // pred_fallthru
      _
    // Predicated region
    $region18: #{tpu_custom_call.1} parent=1 // pred_check
      _
    $region19: #{tpu_custom_call.1} parent=1 // pred_check_branch
      %58 = sbr.rel (0) target = $region21
    $region20: #{tpu_custom_call.1} parent=1 // pred_region
      %s60 = ssub.s32 2048, 2048
      %61 = vsyncadd [#allocation9], %s60
      %s62 = sshll.u32 [#allocation8], 4
      %s63 = int_to_ptr.vmem [resolvable:$true] %s62
      %68 = dma.hbm_to_vmem [thread:$0]  %s4, 2048, %s63, [#allocation9], 128, 128, 8
    $region21: #{tpu_custom_call.1} parent=1 // pred_fallthru
      _
    // Predicated region
    $region22: #{tpu_custom_call.1} parent=1 // pred_check
      _
    $region23: #{tpu_custom_call.1} parent=1 // pred_check_branch
      %70 = sbr.rel (0) target = $region25
    $region24: #{tpu_custom_call.1} parent=1 // pred_region
      _
    $region25: #{tpu_custom_call.1} parent=1 // pred_fallthru
      _
    // Predicated region
    $region26: #{tpu_custom_call.1} parent=1 // pred_check
      _
    $region27: #{tpu_custom_call.1} parent=1 // pred_check_branch
      %72 = sbr.rel (0) target = $region29
    $region28: #{tpu_custom_call.1} parent=1 // pred_region
      %s74 = ssub.s32 2048, 2048
      %75 = vsyncadd [#allocation9], %s74
      %s76 = sshll.u32 [#allocation10], 4
      %s77 = int_to_ptr.vmem [resolvable:$true] %s76
      %82 = dma.hbm_to_vmem [thread:$0]  %s6, 2048, %s77, [#allocation9], 128, 128, 8
    $region29: #{tpu_custom_call.1} parent=1 // pred_fallthru
      _
    // Predicated region
    $region30: #{tpu_custom_call.1} parent=1 // pred_check
      _
    $region31: #{tpu_custom_call.1} parent=1 // pred_check_branch
      %84 = sbr.rel (0) target = $region33
    $region32: #{tpu_custom_call.1} parent=1 // pred_region
      %s86 = ssub.s32 2048, 2048
      %87 = vsyncadd [#allocation12], %s86
      %s88 = sshll.u32 [#allocation11], 4
      %s89 = int_to_ptr.vmem [resolvable:$true] %s88
      %94 = dma.hbm_to_vmem [thread:$0]  %s7, 2048, %s89, [#allocation12], 128, 128, 8
    $region33: #{tpu_custom_call.1} parent=1 // pred_fallthru
      _
    // Predicated region
    $region34: #{tpu_custom_call.1} parent=1 // pred_check
      _
    $region35: #{tpu_custom_call.1} parent=1 // pred_check_branch
      %96 = sbr.rel (0) target = $region37
    $region36: #{tpu_custom_call.1} parent=1 // pred_region
      _
    $region37: #{tpu_custom_call.1} parent=1 // pred_fallthru
      _
    // Predicated region
    $region38: #{tpu_custom_call.1} parent=1 // pred_check
      _
    $region39: #{tpu_custom_call.1} parent=1 // pred_check_branch
      %98 = sbr.rel (0) target = $region41
    $region40: #{tpu_custom_call.1} parent=1 // pred_region
      %99 = dma.done [#allocation3], 2048
    $region41: #{tpu_custom_call.1} parent=1 // pred_fallthru
      _
    // Predicated region
    $region42: #{tpu_custom_call.1} parent=1 // pred_check
      _
    $region43: #{tpu_custom_call.1} parent=1 // pred_check_branch
      %101 = sbr.rel (0) target = $region45
    $region44: #{tpu_custom_call.1} parent=1 // pred_region
      %102 = dma.done [#allocation6], 2048
    $region45: #{tpu_custom_call.1} parent=1 // pred_fallthru
      _
    // Predicated region
    $region46: #{tpu_custom_call.1} parent=1 // pred_check
      _
    $region47: #{tpu_custom_call.1} parent=1 // pred_check_branch
      %104 = sbr.rel (0) target = $region49
    $region48: #{tpu_custom_call.1} parent=1 // pred_region
      %105 = dma.done [#allocation6], 2048
    $region49: #{tpu_custom_call.1} parent=1 // pred_fallthru
      _
    // Predicated region
    $region50: #{tpu_custom_call.1} parent=1 // pred_check
      _
    $region51: #{tpu_custom_call.1} parent=1 // pred_check_branch
      %107 = sbr.rel (0) target = $region53
    $region52: #{tpu_custom_call.1} parent=1 // pred_region
      %108 = dma.done [#allocation9], 2048
    $region53: #{tpu_custom_call.1} parent=1 // pred_fallthru
      _
    // Predicated region
    $region54: #{tpu_custom_call.1} parent=1 // pred_check
      _
    $region55: #{tpu_custom_call.1} parent=1 // pred_check_branch
      %110 = sbr.rel (0) target = $region57
    $region56: #{tpu_custom_call.1} parent=1 // pred_region
      %111 = dma.done [#allocation9], 2048
    $region57: #{tpu_custom_call.1} parent=1 // pred_fallthru
      _
    // Predicated region
    $region58: #{tpu_custom_call.1} parent=1 // pred_check
      _
    $region59: #{tpu_custom_call.1} parent=1 // pred_check_branch
      %113 = sbr.rel (0) target = $region61
    $region60: #{tpu_custom_call.1} parent=1 // pred_region
      %114 = dma.done [#allocation12], 2048
    $region61: #{tpu_custom_call.1} parent=1 // pred_fallthru
      _
    %v115 = vld [vmem:[#allocation2] sm:$0xff]
    %v116 = vld [vmem:[#allocation2 + $0x8] sm:$0xff]
    %v117 = vld [vmem:[#allocation2 + $0x10] sm:$0xff]
    %v118 = vld [vmem:[#allocation2 + $0x18] sm:$0xff]
    %v119 = vld [vmem:[#allocation2 + $0x20] sm:$0xff]
    %v120 = vld [vmem:[#allocation2 + $0x28] sm:$0xff]
    %v121 = vld [vmem:[#allocation2 + $0x30] sm:$0xff]
    %v122 = vld [vmem:[#allocation2 + $0x38] sm:$0xff]
    %v123 = vld [vmem:[#allocation2 + $0x40] sm:$0xff]
    %v124 = vld [vmem:[#allocation2 + $0x48] sm:$0xff]
    %v125 = vld [vmem:[#allocation2 + $0x50] sm:$0xff]
    %v126 = vld [vmem:[#allocation2 + $0x58] sm:$0xff]
    %v127 = vld [vmem:[#allocation2 + $0x60] sm:$0xff]
    %v128 = vld [vmem:[#allocation2 + $0x68] sm:$0xff]
    %v129 = vld [vmem:[#allocation2 + $0x70] sm:$0xff]
    %v130 = vld [vmem:[#allocation2 + $0x78] sm:$0xff]
    %v131 = vld [vmem:[#allocation7] sm:$0xff]
    %v132 = vld [vmem:[#allocation7 + $0x8] sm:$0xff]
    %v133 = vld [vmem:[#allocation7 + $0x10] sm:$0xff]
    %v134 = vld [vmem:[#allocation7 + $0x18] sm:$0xff]
    %v135 = vld [vmem:[#allocation7 + $0x20] sm:$0xff]
    %v136 = vld [vmem:[#allocation7 + $0x28] sm:$0xff]
    %v137 = vld [vmem:[#allocation7 + $0x30] sm:$0xff]
    %v138 = vld [vmem:[#allocation7 + $0x38] sm:$0xff]
    %v139 = vld [vmem:[#allocation7 + $0x40] sm:$0xff]
    %v140 = vld [vmem:[#allocation7 + $0x48] sm:$0xff]
    %v141 = vld [vmem:[#allocation7 + $0x50] sm:$0xff]
    %v142 = vld [vmem:[#allocation7 + $0x58] sm:$0xff]
    %v143 = vld [vmem:[#allocation7 + $0x60] sm:$0xff]
    %v144 = vld [vmem:[#allocation7 + $0x68] sm:$0xff]
    %v145 = vld [vmem:[#allocation7 + $0x70] sm:$0xff]
    %v146 = vld [vmem:[#allocation7 + $0x78] sm:$0xff]
    %v147 = vld [vmem:[%s3] sm:$0x1]
    %v149 = vlaneseq
    %v150 = vshrl.u32 %v149, 7
    %v151 = vsub.s32 0, %v150
    %v152 = vrot.slane %v147, %v151
    %154 = vmatprep.subr.mxu0 0.0
    %155 = vmatpush1.msra.mxu0 %v131
    %156 = vmatprep.subr.mxu0 0.0
    %157 = vmatpush1.msra.mxu0 %v132
    %158 = vmatprep.subr.mxu0 0.0
    %159 = vmatpush1.msra.mxu0 %v133
    %160 = vmatprep.subr.mxu0 0.0
    %161 = vmatpush1.msra.mxu0 %v134
    %162 = vmatprep.subr.mxu0 0.0
    %163 = vmatpush1.msra.mxu0 %v135
    %164 = vmatprep.subr.mxu0 0.0
    %165 = vmatpush1.msra.mxu0 %v136
    %166 = vmatprep.subr.mxu0 0.0
    %167 = vmatpush1.msra.mxu0 %v137
    %168 = vmatprep.subr.mxu0 0.0
    %169 = vmatpush1.msra.mxu0 %v138
    %170 = vmatprep.subr.mxu0 0.0
    %171 = vmatpush1.msra.mxu0 %v139
    %172 = vmatprep.subr.mxu0 0.0
    %173 = vmatpush1.msra.mxu0 %v140
    %174 = vmatprep.subr.mxu0 0.0
    %175 = vmatpush1.msra.mxu0 %v141
    %176 = vmatprep.subr.mxu0 0.0
    %177 = vmatpush1.msra.mxu0 %v142
    %178 = vmatprep.subr.mxu0 0.0
    %179 = vmatpush1.msra.mxu0 %v143
    %180 = vmatprep.subr.mxu0 0.0
    %181 = vmatpush1.msra.mxu0 %v144
    %182 = vmatprep.subr.mxu0 0.0
    %183 = vmatpush1.msra.mxu0 %v145
    %184 = vmatprep.subr.mxu0 0.0
    %185 = vmatpush1.msra.mxu0 %v146
    %186 = vmatprep.subr.mxu0 0.0
    %187 = vmatpush1.msra.mxu0 0.0
    %188 = vmatprep.subr.mxu0 0.0
    %189 = vmatpush1.msra.mxu0 0.0
    %190 = vmatprep.subr.mxu0 0.0
    %191 = vmatpush1.msra.mxu0 0.0
    %192 = vmatprep.subr.mxu0 0.0
    %193 = vmatpush1.msra.mxu0 0.0
    %194 = vmatprep.subr.mxu0 0.0
    %195 = vmatpush1.msra.mxu0 0.0
    %196 = vmatprep.subr.mxu0 0.0
    %197 = vmatpush1.msra.mxu0 0.0
    %198 = vmatprep.subr.mxu0 0.0
    %199 = vmatpush1.msra.mxu0 0.0
    %200 = vmatprep.subr.mxu0 0.0
    %201 = vmatpush1.msra.mxu0 0.0
    %202 = vmatprep.subr.mxu0 0.0
    %203 = vmatpush1.msra.mxu0 0.0
    %204 = vmatprep.subr.mxu0 0.0
    %205 = vmatpush1.msra.mxu0 0.0
    %206 = vmatprep.subr.mxu0 0.0
    %207 = vmatpush1.msra.mxu0 0.0
    %208 = vmatprep.subr.mxu0 0.0
    %209 = vmatpush1.msra.mxu0 0.0
    %210 = vmatprep.subr.mxu0 0.0
    %211 = vmatpush1.msra.mxu0 0.0
    %212 = vmatprep.subr.mxu0 0.0
    %213 = vmatpush1.msra.mxu0 0.0
    %214 = vmatprep.subr.mxu0 0.0
    %215 = vmatpush1.msra.mxu0 0.0
    %216 = vmatprep.subr.mxu0 0.0
    %217 = vmatpush1.msra.mxu0 0.0
    %218 = vmatprep.mubr.f32.mxu0 0.0
    %219 = vmatmul.mubr.f32.gmra.mrb[0].mxu0 %v115
    %v220 = vpop.f32.mrb[0].mxu0
    %v221 = vadd.f32 %v152, %v220
    %v222 = vpop.f32.mrb[0].mxu0
    %223 = vmatprep.mubr.f32.mxu0 0.0
    %224 = vmatmul.mubr.f32.gmra.mrb[0].mxu0 %v116
    %v225 = vpop.f32.mrb[0].mxu0
    %v226 = vadd.f32 %v152, %v225
    %v227 = vpop.f32.mrb[0].mxu0
    %228 = vmatprep.mubr.f32.mxu0 0.0
    %229 = vmatmul.mubr.f32.gmra.mrb[0].mxu0 %v117
    %v230 = vpop.f32.mrb[0].mxu0
    %v231 = vadd.f32 %v152, %v230
    %v232 = vpop.f32.mrb[0].mxu0
    %233 = vmatprep.mubr.f32.mxu0 0.0
    %234 = vmatmul.mubr.f32.gmra.mrb[0].mxu0 %v118
    %v235 = vpop.f32.mrb[0].mxu0
    %v236 = vadd.f32 %v152, %v235
    %v237 = vpop.f32.mrb[0].mxu0
    %238 = vmatprep.mubr.f32.mxu0 0.0
    %239 = vmatmul.mubr.f32.gmra.mrb[0].mxu0 %v119
    %v240 = vpop.f32.mrb[0].mxu0
    %v241 = vadd.f32 %v152, %v240
    %v242 = vpop.f32.mrb[0].mxu0
    %243 = vmatprep.mubr.f32.mxu0 0.0
    %244 = vmatmul.mubr.f32.gmra.mrb[0].mxu0 %v120
    %v245 = vpop.f32.mrb[0].mxu0
    %v246 = vadd.f32 %v152, %v245
    %v247 = vpop.f32.mrb[0].mxu0
    %248 = vmatprep.mubr.f32.mxu0 0.0
    %249 = vmatmul.mubr.f32.gmra.mrb[0].mxu0 %v121
    %v250 = vpop.f32.mrb[0].mxu0
    %v251 = vadd.f32 %v152, %v250
    %v252 = vpop.f32.mrb[0].mxu0
    %253 = vmatprep.mubr.f32.mxu0 0.0
    %254 = vmatmul.mubr.f32.gmra.mrb[0].mxu0 %v122
    %v255 = vpop.f32.mrb[0].mxu0
    %v256 = vadd.f32 %v152, %v255
    %v257 = vpop.f32.mrb[0].mxu0
    %258 = vmatprep.mubr.f32.mxu0 0.0
    %259 = vmatmul.mubr.f32.gmra.mrb[0].mxu0 %v123
    %v260 = vpop.f32.mrb[0].mxu0
    %v261 = vadd.f32 %v152, %v260
    %v262 = vpop.f32.mrb[0].mxu0
    %263 = vmatprep.mubr.f32.mxu0 0.0
    %264 = vmatmul.mubr.f32.gmra.mrb[0].mxu0 %v124
    %v265 = vpop.f32.mrb[0].mxu0
    %v266 = vadd.f32 %v152, %v265
    %v267 = vpop.f32.mrb[0].mxu0
    %268 = vmatprep.mubr.f32.mxu0 0.0
    %269 = vmatmul.mubr.f32.gmra.mrb[0].mxu0 %v125
    %v270 = vpop.f32.mrb[0].mxu0
    %v271 = vadd.f32 %v152, %v270
    %v272 = vpop.f32.mrb[0].mxu0
    %273 = vmatprep.mubr.f32.mxu0 0.0
    %274 = vmatmul.mubr.f32.gmra.mrb[0].mxu0 %v126
    %v275 = vpop.f32.mrb[0].mxu0
    %v276 = vadd.f32 %v152, %v275
    %v277 = vpop.f32.mrb[0].mxu0
    %278 = vmatprep.mubr.f32.mxu0 0.0
    %279 = vmatmul.mubr.f32.gmra.mrb[0].mxu0 %v127
    %v280 = vpop.f32.mrb[0].mxu0
    %v281 = vadd.f32 %v152, %v280
    %v282 = vpop.f32.mrb[0].mxu0
    %283 = vmatprep.mubr.f32.mxu0 0.0
    %284 = vmatmul.mubr.f32.gmra.mrb[0].mxu0 %v128
    %v285 = vpop.f32.mrb[0].mxu0
    %v286 = vadd.f32 %v152, %v285
    %v287 = vpop.f32.mrb[0].mxu0
    %288 = vmatprep.mubr.f32.mxu0 0.0
    %289 = vmatmul.mubr.f32.gmra.mrb[0].mxu0 %v129
    %v290 = vpop.f32.mrb[0].mxu0
    %v291 = vadd.f32 %v152, %v290
    %v292 = vpop.f32.mrb[0].mxu0
    %293 = vmatprep.mubr.f32.mxu0 0.0
    %294 = vmatmul.mubr.f32.gmra.mrb[0].mxu0 %v130
    %v295 = vpop.f32.mrb[0].mxu0
    %v296 = vadd.f32 %v152, %v295
    %v297 = vpop.f32.mrb[0].mxu0
    %298 = vdwg.mxu0
    %v299 = vtanh.pop %v221
    %v300 = vtanh.pop %v226
    %v301 = vtanh.pop %v231
    %v302 = vtanh.pop %v236
    %v303 = vtanh.pop %v241
    %v304 = vtanh.pop %v246
    %v305 = vtanh.pop %v251
    %v306 = vtanh.pop %v256
    %v307 = vtanh.pop %v261
    %v308 = vtanh.pop %v266
    %v309 = vtanh.pop %v271
    %v310 = vtanh.pop %v276
    %v311 = vtanh.pop %v281
    %v312 = vtanh.pop %v286
    %v313 = vtanh.pop %v291
    %v314 = vtanh.pop %v296
    %v315 = vld [vmem:[#allocation5] sm:$0xff]
    %v316 = vld [vmem:[#allocation5 + $0x8] sm:$0xff]
    %v317 = vld [vmem:[#allocation5 + $0x10] sm:$0xff]
    %v318 = vld [vmem:[#allocation5 + $0x18] sm:$0xff]
    %v319 = vld [vmem:[#allocation5 + $0x20] sm:$0xff]
    %v320 = vld [vmem:[#allocation5 + $0x28] sm:$0xff]
    %v321 = vld [vmem:[#allocation5 + $0x30] sm:$0xff]
    %v322 = vld [vmem:[#allocation5 + $0x38] sm:$0xff]
    %v323 = vld [vmem:[#allocation5 + $0x40] sm:$0xff]
    %v324 = vld [vmem:[#allocation5 + $0x48] sm:$0xff]
    %v325 = vld [vmem:[#allocation5 + $0x50] sm:$0xff]
    %v326 = vld [vmem:[#allocation5 + $0x58] sm:$0xff]
    %v327 = vld [vmem:[#allocation5 + $0x60] sm:$0xff]
    %v328 = vld [vmem:[#allocation5 + $0x68] sm:$0xff]
    %v329 = vld [vmem:[#allocation5 + $0x70] sm:$0xff]
    %v330 = vld [vmem:[#allocation5 + $0x78] sm:$0xff]
    %v331 = vld [vmem:[#allocation8] sm:$0xff]
    %v332 = vld [vmem:[#allocation8 + $0x8] sm:$0xff]
    %v333 = vld [vmem:[#allocation8 + $0x10] sm:$0xff]
    %v334 = vld [vmem:[#allocation8 + $0x18] sm:$0xff]
    %v335 = vld [vmem:[#allocation8 + $0x20] sm:$0xff]
    %v336 = vld [vmem:[#allocation8 + $0x28] sm:$0xff]
    %v337 = vld [vmem:[#allocation8 + $0x30] sm:$0xff]
    %v338 = vld [vmem:[#allocation8 + $0x38] sm:$0xff]
    %v339 = vld [vmem:[#allocation8 + $0x40] sm:$0xff]
    %v340 = vld [vmem:[#allocation8 + $0x48] sm:$0xff]
    %v341 = vld [vmem:[#allocation8 + $0x50] sm:$0xff]
    %v342 = vld [vmem:[#allocation8 + $0x58] sm:$0xff]
    %v343 = vld [vmem:[#allocation8 + $0x60] sm:$0xff]
    %v344 = vld [vmem:[#allocation8 + $0x68] sm:$0xff]
    %v345 = vld [vmem:[#allocation8 + $0x70] sm:$0xff]
    %v346 = vld [vmem:[#allocation8 + $0x78] sm:$0xff]
    %v347 = vld [vmem:[%s5] sm:$0x1]
    %v349 = vlaneseq
    %v350 = vshrl.u32 %v349, 7
    %v351 = vsub.s32 0, %v350
    %v352 = vrot.slane %v347, %v351
    %354 = vmatprep.subr.mxu0 0.0
    %355 = vmatpush1.msra.mxu0 %v331
    %356 = vmatprep.subr.mxu0 0.0
    %357 = vmatpush1.msra.mxu0 %v332
    %358 = vmatprep.subr.mxu0 0.0
    %359 = vmatpush1.msra.mxu0 %v333
    %360 = vmatprep.subr.mxu0 0.0
    %361 = vmatpush1.msra.mxu0 %v334
    %362 = vmatprep.subr.mxu0 0.0
    %363 = vmatpush1.msra.mxu0 %v335
    %364 = vmatprep.subr.mxu0 0.0
    %365 = vmatpush1.msra.mxu0 %v336
    %366 = vmatprep.subr.mxu0 0.0
    %367 = vmatpush1.msra.mxu0 %v337
    %368 = vmatprep.subr.mxu0 0.0
    %369 = vmatpush1.msra.mxu0 %v338
    %370 = vmatprep.subr.mxu0 0.0
    %371 = vmatpush1.msra.mxu0 %v339
    %372 = vmatprep.subr.mxu0 0.0
    %373 = vmatpush1.msra.mxu0 %v340
    %374 = vmatprep.subr.mxu0 0.0
    %375 = vmatpush1.msra.mxu0 %v341
    %376 = vmatprep.subr.mxu0 0.0
    %377 = vmatpush1.msra.mxu0 %v342
    %378 = vmatprep.subr.mxu0 0.0
    %379 = vmatpush1.msra.mxu0 %v343
    %380 = vmatprep.subr.mxu0 0.0
    %381 = vmatpush1.msra.mxu0 %v344
    %382 = vmatprep.subr.mxu0 0.0
    %383 = vmatpush1.msra.mxu0 %v345
    %384 = vmatprep.subr.mxu0 0.0
    %385 = vmatpush1.msra.mxu0 %v346
    %386 = vmatprep.subr.mxu0 0.0
    %387 = vmatpush1.msra.mxu0 0.0
    %388 = vmatprep.subr.mxu0 0.0
    %389 = vmatpush1.msra.mxu0 0.0
    %390 = vmatprep.subr.mxu0 0.0
    %391 = vmatpush1.msra.mxu0 0.0
    %392 = vmatprep.subr.mxu0 0.0
    %393 = vmatpush1.msra.mxu0 0.0
    %394 = vmatprep.subr.mxu0 0.0
    %395 = vmatpush1.msra.mxu0 0.0
    %396 = vmatprep.subr.mxu0 0.0
    %397 = vmatpush1.msra.mxu0 0.0
    %398 = vmatprep.subr.mxu0 0.0
    %399 = vmatpush1.msra.mxu0 0.0
    %400 = vmatprep.subr.mxu0 0.0
    %401 = vmatpush1.msra.mxu0 0.0
    %402 = vmatprep.subr.mxu0 0.0
    %403 = vmatpush1.msra.mxu0 0.0
    %404 = vmatprep.subr.mxu0 0.0
    %405 = vmatpush1.msra.mxu0 0.0
    %406 = vmatprep.subr.mxu0 0.0
    %407 = vmatpush1.msra.mxu0 0.0
    %408 = vmatprep.subr.mxu0 0.0
    %409 = vmatpush1.msra.mxu0 0.0
    %410 = vmatprep.subr.mxu0 0.0
    %411 = vmatpush1.msra.mxu0 0.0
    %412 = vmatprep.subr.mxu0 0.0
    %413 = vmatpush1.msra.mxu0 0.0
    %414 = vmatprep.subr.mxu0 0.0
    %415 = vmatpush1.msra.mxu0 0.0
    %416 = vmatprep.subr.mxu0 0.0
    %417 = vmatpush1.msra.mxu0 0.0
    %418 = vmatprep.mubr.f32.mxu0 0.0
    %419 = vmatmul.mubr.f32.gmra.mrb[0].mxu0 %v315
    %v420 = vpop.f32.mrb[0].mxu0
    %v421 = vadd.f32 %v352, %v420
    %v422 = vpop.f32.mrb[0].mxu0
    %423 = vmatprep.mubr.f32.mxu0 0.0
    %424 = vmatmul.mubr.f32.gmra.mrb[0].mxu0 %v316
    %v425 = vpop.f32.mrb[0].mxu0
    %v426 = vadd.f32 %v352, %v425
    %v427 = vpop.f32.mrb[0].mxu0
    %428 = vmatprep.mubr.f32.mxu0 0.0
    %429 = vmatmul.mubr.f32.gmra.mrb[0].mxu0 %v317
    %v430 = vpop.f32.mrb[0].mxu0
    %v431 = vadd.f32 %v352, %v430
    %v432 = vpop.f32.mrb[0].mxu0
    %433 = vmatprep.mubr.f32.mxu0 0.0
    %434 = vmatmul.mubr.f32.gmra.mrb[0].mxu0 %v318
    %v435 = vpop.f32.mrb[0].mxu0
    %v436 = vadd.f32 %v352, %v435
    %v437 = vpop.f32.mrb[0].mxu0
    %438 = vmatprep.mubr.f32.mxu0 0.0
    %439 = vmatmul.mubr.f32.gmra.mrb[0].mxu0 %v319
    %v440 = vpop.f32.mrb[0].mxu0
    %v441 = vadd.f32 %v352, %v440
    %v442 = vpop.f32.mrb[0].mxu0
    %443 = vmatprep.mubr.f32.mxu0 0.0
    %444 = vmatmul.mubr.f32.gmra.mrb[0].mxu0 %v320
    %v445 = vpop.f32.mrb[0].mxu0
    %v446 = vadd.f32 %v352, %v445
    %v447 = vpop.f32.mrb[0].mxu0
    %448 = vmatprep.mubr.f32.mxu0 0.0
    %449 = vmatmul.mubr.f32.gmra.mrb[0].mxu0 %v321
    %v450 = vpop.f32.mrb[0].mxu0
    %v451 = vadd.f32 %v352, %v450
    %v452 = vpop.f32.mrb[0].mxu0
    %453 = vmatprep.mubr.f32.mxu0 0.0
    %454 = vmatmul.mubr.f32.gmra.mrb[0].mxu0 %v322
    %v455 = vpop.f32.mrb[0].mxu0
    %v456 = vadd.f32 %v352, %v455
    %v457 = vpop.f32.mrb[0].mxu0
    %458 = vmatprep.mubr.f32.mxu0 0.0
    %459 = vmatmul.mubr.f32.gmra.mrb[0].mxu0 %v323
    %v460 = vpop.f32.mrb[0].mxu0
    %v461 = vadd.f32 %v352, %v460
    %v462 = vpop.f32.mrb[0].mxu0
    %463 = vmatprep.mubr.f32.mxu0 0.0
    %464 = vmatmul.mubr.f32.gmra.mrb[0].mxu0 %v324
    %v465 = vpop.f32.mrb[0].mxu0
    %v466 = vadd.f32 %v352, %v465
    %v467 = vpop.f32.mrb[0].mxu0
    %468 = vmatprep.mubr.f32.mxu0 0.0
    %469 = vmatmul.mubr.f32.gmra.mrb[0].mxu0 %v325
    %v470 = vpop.f32.mrb[0].mxu0
    %v471 = vadd.f32 %v352, %v470
    %v472 = vpop.f32.mrb[0].mxu0
    %473 = vmatprep.mubr.f32.mxu0 0.0
    %474 = vmatmul.mubr.f32.gmra.mrb[0].mxu0 %v326
    %v475 = vpop.f32.mrb[0].mxu0
    %v476 = vadd.f32 %v352, %v475
    %v477 = vpop.f32.mrb[0].mxu0
    %478 = vmatprep.mubr.f32.mxu0 0.0
    %479 = vmatmul.mubr.f32.gmra.mrb[0].mxu0 %v327
    %v480 = vpop.f32.mrb[0].mxu0
    %v481 = vadd.f32 %v352, %v480
    %v482 = vpop.f32.mrb[0].mxu0
    %483 = vmatprep.mubr.f32.mxu0 0.0
    %484 = vmatmul.mubr.f32.gmra.mrb[0].mxu0 %v328
    %v485 = vpop.f32.mrb[0].mxu0
    %v486 = vadd.f32 %v352, %v485
    %v487 = vpop.f32.mrb[0].mxu0
    %488 = vmatprep.mubr.f32.mxu0 0.0
    %489 = vmatmul.mubr.f32.gmra.mrb[0].mxu0 %v329
    %v490 = vpop.f32.mrb[0].mxu0
    %v491 = vadd.f32 %v352, %v490
    %v492 = vpop.f32.mrb[0].mxu0
    %493 = vmatprep.mubr.f32.mxu0 0.0
    %494 = vmatmul.mubr.f32.gmra.mrb[0].mxu0 %v330
    %v495 = vpop.f32.mrb[0].mxu0
    %v496 = vadd.f32 %v352, %v495
    %v497 = vpop.f32.mrb[0].mxu0
    %498 = vdwg.mxu0
    %v499 = vtanh.pop %v421
    %v500 = vtanh.pop %v426
    %v501 = vtanh.pop %v431
    %v502 = vtanh.pop %v436
    %v503 = vtanh.pop %v441
    %v504 = vtanh.pop %v446
    %v505 = vtanh.pop %v451
    %v506 = vtanh.pop %v456
    %v507 = vtanh.pop %v461
    %v508 = vtanh.pop %v466
    %v509 = vtanh.pop %v471
    %v510 = vtanh.pop %v476
    %v511 = vtanh.pop %v481
    %v512 = vtanh.pop %v486
    %v513 = vtanh.pop %v491
    %v514 = vtanh.pop %v496
    %v515 = vld [vmem:[#allocation10] sm:$0xff]
    %v516 = vld [vmem:[#allocation10 + $0x8] sm:$0xff]
    %v517 = vld [vmem:[#allocation10 + $0x10] sm:$0xff]
    %v518 = vld [vmem:[#allocation10 + $0x18] sm:$0xff]
    %v519 = vld [vmem:[#allocation10 + $0x20] sm:$0xff]
    %v520 = vld [vmem:[#allocation10 + $0x28] sm:$0xff]
    %v521 = vld [vmem:[#allocation10 + $0x30] sm:$0xff]
    %v522 = vld [vmem:[#allocation10 + $0x38] sm:$0xff]
    %v523 = vld [vmem:[#allocation10 + $0x40] sm:$0xff]
    %v524 = vld [vmem:[#allocation10 + $0x48] sm:$0xff]
    %v525 = vld [vmem:[#allocation10 + $0x50] sm:$0xff]
    %v526 = vld [vmem:[#allocation10 + $0x58] sm:$0xff]
    %v527 = vld [vmem:[#allocation10 + $0x60] sm:$0xff]
    %v528 = vld [vmem:[#allocation10 + $0x68] sm:$0xff]
    %v529 = vld [vmem:[#allocation10 + $0x70] sm:$0xff]
    %v530 = vld [vmem:[#allocation10 + $0x78] sm:$0xff]
    %v531 = vld [vmem:[#allocation11] sm:$0xff]
    %v532 = vld [vmem:[#allocation11 + $0x8] sm:$0xff]
    %v533 = vld [vmem:[#allocation11 + $0x10] sm:$0xff]
    %v534 = vld [vmem:[#allocation11 + $0x18] sm:$0xff]
    %v535 = vld [vmem:[#allocation11 + $0x20] sm:$0xff]
    %v536 = vld [vmem:[#allocation11 + $0x28] sm:$0xff]
    %v537 = vld [vmem:[#allocation11 + $0x30] sm:$0xff]
    %v538 = vld [vmem:[#allocation11 + $0x38] sm:$0xff]
    %v539 = vld [vmem:[#allocation11 + $0x40] sm:$0xff]
    %v540 = vld [vmem:[#allocation11 + $0x48] sm:$0xff]
    %v541 = vld [vmem:[#allocation11 + $0x50] sm:$0xff]
    %v542 = vld [vmem:[#allocation11 + $0x58] sm:$0xff]
    %v543 = vld [vmem:[#allocation11 + $0x60] sm:$0xff]
    %v544 = vld [vmem:[#allocation11 + $0x68] sm:$0xff]
    %v545 = vld [vmem:[#allocation11 + $0x70] sm:$0xff]
    %v546 = vld [vmem:[#allocation11 + $0x78] sm:$0xff]
    %547 = vmatprep.subr.mxu0 0.0
    %548 = vmatpush1.msra.mxu0 %v531
    %549 = vmatprep.subr.mxu0 0.0
    %550 = vmatpush1.msra.mxu0 %v532
    %551 = vmatprep.subr.mxu0 0.0
    %552 = vmatpush1.msra.mxu0 %v533
    %553 = vmatprep.subr.mxu0 0.0
    %554 = vmatpush1.msra.mxu0 %v534
    %555 = vmatprep.subr.mxu0 0.0
    %556 = vmatpush1.msra.mxu0 %v535
    %557 = vmatprep.subr.mxu0 0.0
    %558 = vmatpush1.msra.mxu0 %v536
    %559 = vmatprep.subr.mxu0 0.0
    %560 = vmatpush1.msra.mxu0 %v537
    %561 = vmatprep.subr.mxu0 0.0
    %562 = vmatpush1.msra.mxu0 %v538
    %563 = vmatprep.subr.mxu0 0.0
    %564 = vmatpush1.msra.mxu0 %v539
    %565 = vmatprep.subr.mxu0 0.0
    %566 = vmatpush1.msra.mxu0 %v540
    %567 = vmatprep.subr.mxu0 0.0
    %568 = vmatpush1.msra.mxu0 %v541
    %569 = vmatprep.subr.mxu0 0.0
    %570 = vmatpush1.msra.mxu0 %v542
    %571 = vmatprep.subr.mxu0 0.0
    %572 = vmatpush1.msra.mxu0 %v543
    %573 = vmatprep.subr.mxu0 0.0
    %574 = vmatpush1.msra.mxu0 %v544
    %575 = vmatprep.subr.mxu0 0.0
    %576 = vmatpush1.msra.mxu0 %v545
    %577 = vmatprep.subr.mxu0 0.0
    %578 = vmatpush1.msra.mxu0 %v546
    %579 = vmatprep.subr.mxu0 0.0
    %580 = vmatpush1.msra.mxu0 0.0
    %581 = vmatprep.subr.mxu0 0.0
    %582 = vmatpush1.msra.mxu0 0.0
    %583 = vmatprep.subr.mxu0 0.0
    %584 = vmatpush1.msra.mxu0 0.0
    %585 = vmatprep.subr.mxu0 0.0
    %586 = vmatpush1.msra.mxu0 0.0
    %587 = vmatprep.subr.mxu0 0.0
    %588 = vmatpush1.msra.mxu0 0.0
    %589 = vmatprep.subr.mxu0 0.0
    %590 = vmatpush1.msra.mxu0 0.0
    %591 = vmatprep.subr.mxu0 0.0
    %592 = vmatpush1.msra.mxu0 0.0
    %593 = vmatprep.subr.mxu0 0.0
    %594 = vmatpush1.msra.mxu0 0.0
    %595 = vmatprep.subr.mxu0 0.0
    %596 = vmatpush1.msra.mxu0 0.0
    %597 = vmatprep.subr.mxu0 0.0
    %598 = vmatpush1.msra.mxu0 0.0
    %599 = vmatprep.subr.mxu0 0.0
    %600 = vmatpush1.msra.mxu0 0.0
    %601 = vmatprep.subr.mxu0 0.0
    %602 = vmatpush1.msra.mxu0 0.0
    %603 = vmatprep.subr.mxu0 0.0
    %604 = vmatpush1.msra.mxu0 0.0
    %605 = vmatprep.subr.mxu0 0.0
    %606 = vmatpush1.msra.mxu0 0.0
    %607 = vmatprep.subr.mxu0 0.0
    %608 = vmatpush1.msra.mxu0 0.0
    %609 = vmatprep.subr.mxu0 0.0
    %610 = vmatpush1.msra.mxu0 0.0
    %611 = vmatprep.mubr.f32.mxu0 0.0
    %612 = vmatmul.mubr.f32.gmra.mrb[0].mxu0 %v499
    %v613 = vpop.f32.mrb[0].mxu0
    %v614 = vadd.f32 0.0, %v613
    %v615 = vpop.f32.mrb[0].mxu0
    %616 = vmatprep.mubr.f32.mxu0 0.0
    %617 = vmatmul.mubr.f32.gmra.mrb[0].mxu0 %v500
    %v618 = vpop.f32.mrb[0].mxu0
    %v619 = vadd.f32 0.0, %v618
    %v620 = vpop.f32.mrb[0].mxu0
    %621 = vmatprep.mubr.f32.mxu0 0.0
    %622 = vmatmul.mubr.f32.gmra.mrb[0].mxu0 %v501
    %v623 = vpop.f32.mrb[0].mxu0
    %v624 = vadd.f32 0.0, %v623
    %v625 = vpop.f32.mrb[0].mxu0
    %626 = vmatprep.mubr.f32.mxu0 0.0
    %627 = vmatmul.mubr.f32.gmra.mrb[0].mxu0 %v502
    %v628 = vpop.f32.mrb[0].mxu0
    %v629 = vadd.f32 0.0, %v628
    %v630 = vpop.f32.mrb[0].mxu0
    %631 = vmatprep.mubr.f32.mxu0 0.0
    %632 = vmatmul.mubr.f32.gmra.mrb[0].mxu0 %v503
    %v633 = vpop.f32.mrb[0].mxu0
    %v634 = vadd.f32 0.0, %v633
    %v635 = vpop.f32.mrb[0].mxu0
    %636 = vmatprep.mubr.f32.mxu0 0.0
    %637 = vmatmul.mubr.f32.gmra.mrb[0].mxu0 %v504
    %v638 = vpop.f32.mrb[0].mxu0
    %v639 = vadd.f32 0.0, %v638
    %v640 = vpop.f32.mrb[0].mxu0
    %641 = vmatprep.mubr.f32.mxu0 0.0
    %642 = vmatmul.mubr.f32.gmra.mrb[0].mxu0 %v505
    %v643 = vpop.f32.mrb[0].mxu0
    %v644 = vadd.f32 0.0, %v643
    %v645 = vpop.f32.mrb[0].mxu0
    %646 = vmatprep.mubr.f32.mxu0 0.0
    %647 = vmatmul.mubr.f32.gmra.mrb[0].mxu0 %v506
    %v648 = vpop.f32.mrb[0].mxu0
    %v649 = vadd.f32 0.0, %v648
    %v650 = vpop.f32.mrb[0].mxu0
    %651 = vmatprep.mubr.f32.mxu0 0.0
    %652 = vmatmul.mubr.f32.gmra.mrb[0].mxu0 %v507
    %v653 = vpop.f32.mrb[0].mxu0
    %v654 = vadd.f32 0.0, %v653
    %v655 = vpop.f32.mrb[0].mxu0
    %656 = vmatprep.mubr.f32.mxu0 0.0
    %657 = vmatmul.mubr.f32.gmra.mrb[0].mxu0 %v508
    %v658 = vpop.f32.mrb[0].mxu0
    %v659 = vadd.f32 0.0, %v658
    %v660 = vpop.f32.mrb[0].mxu0
    %661 = vmatprep.mubr.f32.mxu0 0.0
    %662 = vmatmul.mubr.f32.gmra.mrb[0].mxu0 %v509
    %v663 = vpop.f32.mrb[0].mxu0
    %v664 = vadd.f32 0.0, %v663
    %v665 = vpop.f32.mrb[0].mxu0
    %666 = vmatprep.mubr.f32.mxu0 0.0
    %667 = vmatmul.mubr.f32.gmra.mrb[0].mxu0 %v510
    %v668 = vpop.f32.mrb[0].mxu0
    %v669 = vadd.f32 0.0, %v668
    %v670 = vpop.f32.mrb[0].mxu0
    %671 = vmatprep.mubr.f32.mxu0 0.0
    %672 = vmatmul.mubr.f32.gmra.mrb[0].mxu0 %v511
    %v673 = vpop.f32.mrb[0].mxu0
    %v674 = vadd.f32 0.0, %v673
    %v675 = vpop.f32.mrb[0].mxu0
    %676 = vmatprep.mubr.f32.mxu0 0.0
    %677 = vmatmul.mubr.f32.gmra.mrb[0].mxu0 %v512
    %v678 = vpop.f32.mrb[0].mxu0
    %v679 = vadd.f32 0.0, %v678
    %v680 = vpop.f32.mrb[0].mxu0
    %681 = vmatprep.mubr.f32.mxu0 0.0
    %682 = vmatmul.mubr.f32.gmra.mrb[0].mxu0 %v513
    %v683 = vpop.f32.mrb[0].mxu0
    %v684 = vadd.f32 0.0, %v683
    %v685 = vpop.f32.mrb[0].mxu0
    %686 = vmatprep.mubr.f32.mxu0 0.0
    %687 = vmatmul.mubr.f32.gmra.mrb[0].mxu0 %v514
    %v688 = vpop.f32.mrb[0].mxu0
    %v689 = vadd.f32 0.0, %v688
    %v690 = vpop.f32.mrb[0].mxu0
    %691 = vdwg.mxu0
    %692 = vmatprep.subr.mxu0 0.0
    %693 = vmatpush1.msra.mxu0 %v515
    %694 = vmatprep.subr.mxu0 0.0
    %695 = vmatpush1.msra.mxu0 %v516
    %696 = vmatprep.subr.mxu0 0.0
    %697 = vmatpush1.msra.mxu0 %v517
    %698 = vmatprep.subr.mxu0 0.0
    %699 = vmatpush1.msra.mxu0 %v518
    %700 = vmatprep.subr.mxu0 0.0
    %701 = vmatpush1.msra.mxu0 %v519
    %702 = vmatprep.subr.mxu0 0.0
    %703 = vmatpush1.msra.mxu0 %v520
    %704 = vmatprep.subr.mxu0 0.0
    %705 = vmatpush1.msra.mxu0 %v521
    %706 = vmatprep.subr.mxu0 0.0
    %707 = vmatpush1.msra.mxu0 %v522
    %708 = vmatprep.subr.mxu0 0.0
    %709 = vmatpush1.msra.mxu0 %v523
    %710 = vmatprep.subr.mxu0 0.0
    %711 = vmatpush1.msra.mxu0 %v524
    %712 = vmatprep.subr.mxu0 0.0
    %713 = vmatpush1.msra.mxu0 %v525
    %714 = vmatprep.subr.mxu0 0.0
    %715 = vmatpush1.msra.mxu0 %v526
    %716 = vmatprep.subr.mxu0 0.0
    %717 = vmatpush1.msra.mxu0 %v527
    %718 = vmatprep.subr.mxu0 0.0
    %719 = vmatpush1.msra.mxu0 %v528
    %720 = vmatprep.subr.mxu0 0.0
    %721 = vmatpush1.msra.mxu0 %v529
    %722 = vmatprep.subr.mxu0 0.0
    %723 = vmatpush1.msra.mxu0 %v530
    %724 = vmatprep.subr.mxu0 0.0
    %725 = vmatpush1.msra.mxu0 0.0
    %726 = vmatprep.subr.mxu0 0.0
    %727 = vmatpush1.msra.mxu0 0.0
    %728 = vmatprep.subr.mxu0 0.0
    %729 = vmatpush1.msra.mxu0 0.0
    %730 = vmatprep.subr.mxu0 0.0
    %731 = vmatpush1.msra.mxu0 0.0
    %732 = vmatprep.subr.mxu0 0.0
    %733 = vmatpush1.msra.mxu0 0.0
    %734 = vmatprep.subr.mxu0 0.0
    %735 = vmatpush1.msra.mxu0 0.0
    %736 = vmatprep.subr.mxu0 0.0
    %737 = vmatpush1.msra.mxu0 0.0
    %738 = vmatprep.subr.mxu0 0.0
    %739 = vmatpush1.msra.mxu0 0.0
    %740 = vmatprep.subr.mxu0 0.0
    %741 = vmatpush1.msra.mxu0 0.0
    %742 = vmatprep.subr.mxu0 0.0
    %743 = vmatpush1.msra.mxu0 0.0
    %744 = vmatprep.subr.mxu0 0.0
    %745 = vmatpush1.msra.mxu0 0.0
    %746 = vmatprep.subr.mxu0 0.0
    %747 = vmatpush1.msra.mxu0 0.0
    %748 = vmatprep.subr.mxu0 0.0
    %749 = vmatpush1.msra.mxu0 0.0
    %750 = vmatprep.subr.mxu0 0.0
    %751 = vmatpush1.msra.mxu0 0.0
    %752 = vmatprep.subr.mxu0 0.0
    %753 = vmatpush1.msra.mxu0 0.0
    %754 = vmatprep.subr.mxu0 0.0
    %755 = vmatpush1.msra.mxu0 0.0
    %756 = vmatprep.mubr.f32.mxu0 0.0
    %757 = vmatmul.mubr.f32.gmra.mrb[0].mxu0 %v299
    %v758 = vpop.f32.mrb[0].mxu0
    %v759 = vadd.f32 %v614, %v758
    %v760 = vpop.f32.mrb[0].mxu0
    %761 = vmatprep.mubr.f32.mxu0 0.0
    %762 = vmatmul.mubr.f32.gmra.mrb[0].mxu0 %v300
    %v763 = vpop.f32.mrb[0].mxu0
    %v764 = vadd.f32 %v619, %v763
    %v765 = vpop.f32.mrb[0].mxu0
    %766 = vmatprep.mubr.f32.mxu0 0.0
    %767 = vmatmul.mubr.f32.gmra.mrb[0].mxu0 %v301
    %v768 = vpop.f32.mrb[0].mxu0
    %v769 = vadd.f32 %v624, %v768
    %v770 = vpop.f32.mrb[0].mxu0
    %771 = vmatprep.mubr.f32.mxu0 0.0
    %772 = vmatmul.mubr.f32.gmra.mrb[0].mxu0 %v302
    %v773 = vpop.f32.mrb[0].mxu0
    %v774 = vadd.f32 %v629, %v773
    %v775 = vpop.f32.mrb[0].mxu0
    %776 = vmatprep.mubr.f32.mxu0 0.0
    %777 = vmatmul.mubr.f32.gmra.mrb[0].mxu0 %v303
    %v778 = vpop.f32.mrb[0].mxu0
    %v779 = vadd.f32 %v634, %v778
    %v780 = vpop.f32.mrb[0].mxu0
    %781 = vmatprep.mubr.f32.mxu0 0.0
    %782 = vmatmul.mubr.f32.gmra.mrb[0].mxu0 %v304
    %v783 = vpop.f32.mrb[0].mxu0
    %v784 = vadd.f32 %v639, %v783
    %v785 = vpop.f32.mrb[0].mxu0
    %786 = vmatprep.mubr.f32.mxu0 0.0
    %787 = vmatmul.mubr.f32.gmra.mrb[0].mxu0 %v305
    %v788 = vpop.f32.mrb[0].mxu0
    %v789 = vadd.f32 %v644, %v788
    %v790 = vpop.f32.mrb[0].mxu0
    %791 = vmatprep.mubr.f32.mxu0 0.0
    %792 = vmatmul.mubr.f32.gmra.mrb[0].mxu0 %v306
    %v793 = vpop.f32.mrb[0].mxu0
    %v794 = vadd.f32 %v649, %v793
    %v795 = vpop.f32.mrb[0].mxu0
    %796 = vmatprep.mubr.f32.mxu0 0.0
    %797 = vmatmul.mubr.f32.gmra.mrb[0].mxu0 %v307
    %v798 = vpop.f32.mrb[0].mxu0
    %v799 = vadd.f32 %v654, %v798
    %v800 = vpop.f32.mrb[0].mxu0
    %801 = vmatprep.mubr.f32.mxu0 0.0
    %802 = vmatmul.mubr.f32.gmra.mrb[0].mxu0 %v308
    %v803 = vpop.f32.mrb[0].mxu0
    %v804 = vadd.f32 %v659, %v803
    %v805 = vpop.f32.mrb[0].mxu0
    %806 = vmatprep.mubr.f32.mxu0 0.0
    %807 = vmatmul.mubr.f32.gmra.mrb[0].mxu0 %v309
    %v808 = vpop.f32.mrb[0].mxu0
    %v809 = vadd.f32 %v664, %v808
    %v810 = vpop.f32.mrb[0].mxu0
    %811 = vmatprep.mubr.f32.mxu0 0.0
    %812 = vmatmul.mubr.f32.gmra.mrb[0].mxu0 %v310
    %v813 = vpop.f32.mrb[0].mxu0
    %v814 = vadd.f32 %v669, %v813
    %v815 = vpop.f32.mrb[0].mxu0
    %816 = vmatprep.mubr.f32.mxu0 0.0
    %817 = vmatmul.mubr.f32.gmra.mrb[0].mxu0 %v311
    %v818 = vpop.f32.mrb[0].mxu0
    %v819 = vadd.f32 %v674, %v818
    %v820 = vpop.f32.mrb[0].mxu0
    %821 = vmatprep.mubr.f32.mxu0 0.0
    %822 = vmatmul.mubr.f32.gmra.mrb[0].mxu0 %v312
    %v823 = vpop.f32.mrb[0].mxu0
    %v824 = vadd.f32 %v679, %v823
    %v825 = vpop.f32.mrb[0].mxu0
    %826 = vmatprep.mubr.f32.mxu0 0.0
    %827 = vmatmul.mubr.f32.gmra.mrb[0].mxu0 %v313
    %v828 = vpop.f32.mrb[0].mxu0
    %v829 = vadd.f32 %v684, %v828
    %v830 = vpop.f32.mrb[0].mxu0
    %831 = vmatprep.mubr.f32.mxu0 0.0
    %832 = vmatmul.mubr.f32.gmra.mrb[0].mxu0 %v314
    %v833 = vpop.f32.mrb[0].mxu0
    %v834 = vadd.f32 %v689, %v833
    %v835 = vpop.f32.mrb[0].mxu0
    %836 = vdwg.mxu0
    %v837 = vld [vmem:[%s8] sm:$0x1]
    %v839 = vlaneseq
    %v840 = vshrl.u32 %v839, 7
    %v841 = vsub.s32 0, %v840
    %v842 = vrot.slane %v837, %v841
    %v844 = vadd.f32 %v759, %v842
    %v845 = vadd.f32 %v764, %v842
    %v846 = vadd.f32 %v769, %v842
    %v847 = vadd.f32 %v774, %v842
    %v848 = vadd.f32 %v779, %v842
    %v849 = vadd.f32 %v784, %v842
    %v850 = vadd.f32 %v789, %v842
    %v851 = vadd.f32 %v794, %v842
    %v852 = vadd.f32 %v799, %v842
    %v853 = vadd.f32 %v804, %v842
    %v854 = vadd.f32 %v809, %v842
    %v855 = vadd.f32 %v814, %v842
    %v856 = vadd.f32 %v819, %v842
    %v857 = vadd.f32 %v824, %v842
    %v858 = vadd.f32 %v829, %v842
    %v859 = vadd.f32 %v834, %v842
    %v860 = vxor.u32 %v844, 2147483648
    %v861 = vxor.u32 %v845, 2147483648
    %v862 = vxor.u32 %v846, 2147483648
    %v863 = vxor.u32 %v847, 2147483648
    %v864 = vxor.u32 %v848, 2147483648
    %v865 = vxor.u32 %v849, 2147483648
    %v866 = vxor.u32 %v850, 2147483648
    %v867 = vxor.u32 %v851, 2147483648
    %v868 = vxor.u32 %v852, 2147483648
    %v869 = vxor.u32 %v853, 2147483648
    %v870 = vxor.u32 %v854, 2147483648
    %v871 = vxor.u32 %v855, 2147483648
    %v872 = vxor.u32 %v856, 2147483648
    %v873 = vxor.u32 %v857, 2147483648
    %v874 = vxor.u32 %v858, 2147483648
    %v875 = vxor.u32 %v859, 2147483648
    %v876 = vmul.f32 %v860, 1.442695
    %v877 = vpow.pop %v876
    %v878 = vmul.f32 %v861, 1.442695
    %v879 = vpow.pop %v878
    %v880 = vmul.f32 %v862, 1.442695
    %v881 = vpow.pop %v880
    %v882 = vmul.f32 %v863, 1.442695
    %v883 = vpow.pop %v882
    %v884 = vmul.f32 %v864, 1.442695
    %v885 = vpow.pop %v884
    %v886 = vmul.f32 %v865, 1.442695
    %v887 = vpow.pop %v886
    %v888 = vmul.f32 %v866, 1.442695
    %v889 = vpow.pop %v888
    %v890 = vmul.f32 %v867, 1.442695
    %v891 = vpow.pop %v890
    %v892 = vmul.f32 %v868, 1.442695
    %v893 = vpow.pop %v892
    %v894 = vmul.f32 %v869, 1.442695
    %v895 = vpow.pop %v894
    %v896 = vmul.f32 %v870, 1.442695
    %v897 = vpow.pop %v896
    %v898 = vmul.f32 %v871, 1.442695
    %v899 = vpow.pop %v898
    %v900 = vmul.f32 %v872, 1.442695
    %v901 = vpow.pop %v900
    %v902 = vmul.f32 %v873, 1.442695
    %v903 = vpow.pop %v902
    %v904 = vmul.f32 %v874, 1.442695
    %v905 = vpow.pop %v904
    %v906 = vmul.f32 %v875, 1.442695
    %v907 = vpow.pop %v906
    %v908 = vadd.f32 %v877, 1.0
    %v909 = vadd.f32 %v879, 1.0
    %v910 = vadd.f32 %v881, 1.0
    %v911 = vadd.f32 %v883, 1.0
    %v912 = vadd.f32 %v885, 1.0
    %v913 = vadd.f32 %v887, 1.0
    %v914 = vadd.f32 %v889, 1.0
    %v915 = vadd.f32 %v891, 1.0
    %v916 = vadd.f32 %v893, 1.0
    %v917 = vadd.f32 %v895, 1.0
    %v918 = vadd.f32 %v897, 1.0
    %v919 = vadd.f32 %v899, 1.0
    %v920 = vadd.f32 %v901, 1.0
    %v921 = vadd.f32 %v903, 1.0
    %v922 = vadd.f32 %v905, 1.0
    %v923 = vadd.f32 %v907, 1.0
    %v924 = vrcp.pop %v908
    %v925 = vmul.f32 1.0, %v924
    %v926 = vrcp.pop %v909
    %v927 = vmul.f32 1.0, %v926
    %v928 = vrcp.pop %v910
    %v929 = vmul.f32 1.0, %v928
    %v930 = vrcp.pop %v911
    %v931 = vmul.f32 1.0, %v930
    %v932 = vrcp.pop %v912
    %v933 = vmul.f32 1.0, %v932
    %v934 = vrcp.pop %v913
    %v935 = vmul.f32 1.0, %v934
    %v936 = vrcp.pop %v914
    %v937 = vmul.f32 1.0, %v936
    %v938 = vrcp.pop %v915
    %v939 = vmul.f32 1.0, %v938
    %v940 = vrcp.pop %v916
    %v941 = vmul.f32 1.0, %v940
    %v942 = vrcp.pop %v917
    %v943 = vmul.f32 1.0, %v942
    %v944 = vrcp.pop %v918
    %v945 = vmul.f32 1.0, %v944
    %v946 = vrcp.pop %v919
    %v947 = vmul.f32 1.0, %v946
    %v948 = vrcp.pop %v920
    %v949 = vmul.f32 1.0, %v948
    %v950 = vrcp.pop %v921
    %v951 = vmul.f32 1.0, %v950
    %v952 = vrcp.pop %v922
    %v953 = vmul.f32 1.0, %v952
    %v954 = vrcp.pop %v923
    %v955 = vmul.f32 1.0, %v954
    %v956 = vsub.f32 %v299, %v499
    %v957 = vsub.f32 %v300, %v500
    %v958 = vsub.f32 %v301, %v501
    %v959 = vsub.f32 %v302, %v502
    %v960 = vsub.f32 %v303, %v503
    %v961 = vsub.f32 %v304, %v504
    %v962 = vsub.f32 %v305, %v505
    %v963 = vsub.f32 %v306, %v506
    %v964 = vsub.f32 %v307, %v507
    %v965 = vsub.f32 %v308, %v508
    %v966 = vsub.f32 %v309, %v509
    %v967 = vsub.f32 %v310, %v510
    %v968 = vsub.f32 %v311, %v511
    %v969 = vsub.f32 %v312, %v512
    %v970 = vsub.f32 %v313, %v513
    %v971 = vsub.f32 %v314, %v514
    %v972 = vmul.f32 %v925, %v956
    %v973 = vmul.f32 %v927, %v957
    %v974 = vmul.f32 %v929, %v958
    %v975 = vmul.f32 %v931, %v959
    %v976 = vmul.f32 %v933, %v960
    %v977 = vmul.f32 %v935, %v961
    %v978 = vmul.f32 %v937, %v962
    %v979 = vmul.f32 %v939, %v963
    %v980 = vmul.f32 %v941, %v964
    %v981 = vmul.f32 %v943, %v965
    %v982 = vmul.f32 %v945, %v966
    %v983 = vmul.f32 %v947, %v967
    %v984 = vmul.f32 %v949, %v968
    %v985 = vmul.f32 %v951, %v969
    %v986 = vmul.f32 %v953, %v970
    %v987 = vmul.f32 %v955, %v971
    %v988 = vadd.f32 %v499, %v972
    %v989 = vadd.f32 %v500, %v973
    %v990 = vadd.f32 %v501, %v974
    %v991 = vadd.f32 %v502, %v975
    %v992 = vadd.f32 %v503, %v976
    %v993 = vadd.f32 %v504, %v977
    %v994 = vadd.f32 %v505, %v978
    %v995 = vadd.f32 %v506, %v979
    %v996 = vadd.f32 %v507, %v980
    %v997 = vadd.f32 %v508, %v981
    %v998 = vadd.f32 %v509, %v982
    %v999 = vadd.f32 %v510, %v983
    %v1000 = vadd.f32 %v511, %v984
    %v1001 = vadd.f32 %v512, %v985
    %v1002 = vadd.f32 %v513, %v986
    %v1003 = vadd.f32 %v514, %v987
    %1004 = vst [vmem:[#allocation13] sm:$0xff] %v988
    %1005 = vst [vmem:[#allocation13 + $0x8] sm:$0xff] %v989
    %1006 = vst [vmem:[#allocation13 + $0x10] sm:$0xff] %v990
    %1007 = vst [vmem:[#allocation13 + $0x18] sm:$0xff] %v991
    %1008 = vst [vmem:[#allocation13 + $0x20] sm:$0xff] %v992
    %1009 = vst [vmem:[#allocation13 + $0x28] sm:$0xff] %v993
    %1010 = vst [vmem:[#allocation13 + $0x30] sm:$0xff] %v994
    %1011 = vst [vmem:[#allocation13 + $0x38] sm:$0xff] %v995
    %1012 = vst [vmem:[#allocation13 + $0x40] sm:$0xff] %v996
    %1013 = vst [vmem:[#allocation13 + $0x48] sm:$0xff] %v997
    %1014 = vst [vmem:[#allocation13 + $0x50] sm:$0xff] %v998
    %1015 = vst [vmem:[#allocation13 + $0x58] sm:$0xff] %v999
    %1016 = vst [vmem:[#allocation13 + $0x60] sm:$0xff] %v1000
    %1017 = vst [vmem:[#allocation13 + $0x68] sm:$0xff] %v1001
    %1018 = vst [vmem:[#allocation13 + $0x70] sm:$0xff] %v1002
    %1019 = vst [vmem:[#allocation13 + $0x78] sm:$0xff] %v1003
    // Predicated region
    $region62: #{tpu_custom_call.1} parent=1 // pred_check
      _
    $region63: #{tpu_custom_call.1} parent=1 // pred_check_branch
      %1021 = sbr.rel (0) target = $region65
    $region64: #{tpu_custom_call.1} parent=1 // pred_region
      %s1023 = ssub.s32 2048, 2048
      %1024 = vsyncadd [#allocation4], %s1023
      %s1025 = sshll.u32 [#allocation13], 4
      %s1026 = int_to_ptr.vmem [resolvable:$true] %s1025
      %1031 = dma.vmem_to_hbm [thread:$0]  %s1026, 2048, %s9, [#allocation4], 128, 128, 8
    $region65: #{tpu_custom_call.1} parent=1 // pred_fallthru
      _
    // Predicated region
    $region66: #{tpu_custom_call.1} parent=1 // pred_check
      _
    $region67: #{tpu_custom_call.1} parent=1 // pred_check_branch
      %1033 = sbr.rel (0) target = $region69
    $region68: #{tpu_custom_call.1} parent=1 // pred_region
      %1034 = dma.done [#allocation4], 2048
    $region69: #{tpu_custom_call.1} parent=1 // pred_fallthru
      _
    %1035 = vsyncpa [#allocation3], 1
    %1036 = vsyncpa [#allocation6], 1
    %1037 = vsyncpa [#allocation9], 1
    %1038 = vsyncpa [#allocation12], 1
    %1039 = vsyncpa [#allocation4], 1

</llo_original>
